<compile_context>
chip_gen: v7x
topology: tpu7x:2x2x1
jax: 0.10.0
libtpu: 0.0.40
codegen_flags: <defaults>
</compile_context>

<pallas_src>
import jax
import jax.numpy as jnp
from jax.experimental import pallas as pl
from jax.experimental.pallas import tpu as pltpu


def _round_up(n: int, m: int) -> int:
    return ((n + m - 1) // m) * m


def _mlp_kernel(x_ref, w1_ref, b1_ref, w2_ref, b2_ref, o_ref):
    # x arrives as f32 straight from HBM; cast to bf16 here (in-kernel VPU cast,
    # hidden under the DMA) so no separate XLA cast pass touches HBM.
    x = x_ref[...].astype(jnp.bfloat16)
    h = jnp.dot(x, w1_ref[...], preferred_element_type=jnp.float32)
    h = jnp.maximum(h + b1_ref[...], 0.0)  # bias + ReLU in f32 (safe on v5e VPU)
    y = jnp.dot(h.astype(jnp.bfloat16), w2_ref[...],
                preferred_element_type=jnp.float32)
    o_ref[...] = (y + b2_ref[...]).astype(o_ref.dtype)


def small_nn_forward(x, w1, b1, w2, b2, *, tile_b: int = 8192):
    """Forward pass of SmallNN.

    x:  (B, in_size) float32
    w1: (in_size, hidden) float32   (pre-transposed vs. PyTorch layout)
    b1: (1, hidden) float32
    w2: (hidden, out_size) float32
    b2: (1, out_size) float32
    returns (B, out_size) float32
    """
    B, in_size = x.shape
    hidden = w1.shape[1]
    out_size = w2.shape[1]

    # Batch tile: as big as comfortably fits scoped VMEM (amortizes per-step
    # overhead), 16-row aligned for bf16 sublane packing, clamped so a block
    # never exceeds the (8-aligned) batch.
    tb = min(_round_up(tile_b, 16), _round_up(B, 8))
    grid = (pl.cdiv(B, tb),)  # final block may be partial; OOB writes are dropped

    # Tiny weight casts stay in the wrapper (negligible HBM traffic).
    w1_bf = w1.astype(jnp.bfloat16)
    w2_bf = w2.astype(jnp.bfloat16)

    return pl.pallas_call(
        _mlp_kernel,
        out_shape=jax.ShapeDtypeStruct((B, out_size), jnp.float32),
        grid=grid,
        in_specs=[
            pl.BlockSpec((tb, in_size), lambda i: (i, 0)),        # x: batch-blocked
            pl.BlockSpec((in_size, hidden), lambda i: (0, 0)),    # w1: VMEM-resident
            pl.BlockSpec((1, hidden), lambda i: (0, 0)),          # b1: resident
            pl.BlockSpec((hidden, out_size), lambda i: (0, 0)),   # w2: resident
            pl.BlockSpec((1, out_size), lambda i: (0, 0)),        # b2: resident
        ],
        out_specs=pl.BlockSpec((tb, out_size), lambda i: (i, 0)),
        compiler_params=pltpu.CompilerParams(
            dimension_semantics=("parallel",),      # v7x TODO: CORE_PARALLEL
            vmem_limit_bytes=48 * 1024 * 1024,       # allow big batch tiles, v7x-safe
        ),
    )(x, w1_bf, b1, w2_bf, b2)


def init_small_nn(key, in_size, out_size, hidden=30):
    """Deterministic init mimicking PyTorch nn.Linear default (uniform +/- 1/sqrt(fan_in)).
    Weights are stored already transposed to (in, out)."""
    k1, k2, k3, k4 = jax.random.split(key, 4)
    bound1 = 1.0 / (in_size ** 0.5)
    bound2 = 1.0 / (hidden ** 0.5)
    w1 = jax.random.uniform(k1, (in_size, hidden), jnp.float32, -bound1, bound1)
    b1 = jax.random.uniform(k2, (1, hidden), jnp.float32, -bound1, bound1)
    w2 = jax.random.uniform(k3, (hidden, out_size), jnp.float32, -bound2, bound2)
    b2 = jax.random.uniform(k4, (1, out_size), jnp.float32, -bound2, bound2)
    return w1, b1, w2, b2


def _matched_reference(x, w1, b1, w2, b2):
    """Pure-JAX reference with the kernel's exact precision (bf16 MXU inputs, f32 acc)."""
    xb = x.astype(jnp.bfloat16)
    w1b = w1.astype(jnp.bfloat16)
    w2b = w2.astype(jnp.bfloat16)
    h = jnp.maximum(jnp.dot(xb, w1b, preferred_element_type=jnp.float32) + b1, 0.0)
    return jnp.dot(h.astype(jnp.bfloat16), w2b, preferred_element_type=jnp.float32) + b2


def _f32_reference(x, w1, b1, w2, b2):
    """True f32 SmallNN forward (PyTorch semantics)."""
    h = jnp.maximum(x @ w1 + b1, 0.0)
    return h @ w2 + b2


if __name__ == "__main__":
    key = jax.random.PRNGKey(0)
    k_x, k_p, k_x2 = jax.random.split(key, 3)

    in_size, out_size = 16, 4
    w1, b1, w2, b2 = init_small_nn(k_p, in_size, out_size)

    # Small batch (single grid step).
    batch = 8
    x = jax.random.normal(k_x, (batch, in_size), jnp.float32)
    y = small_nn_forward(x, w1, b1, w2, b2)
    jax.block_until_ready(y)
    assert y.shape == (batch, out_size)
    assert jnp.allclose(y, _matched_reference(x, w1, b1, w2, b2), atol=1e-3, rtol=1e-3)
    # bf16-input drift vs. the true f32 module stays tiny for these shapes.
    assert float(jnp.max(jnp.abs(y - _f32_reference(x, w1, b1, w2, b2)))) < 5e-2

    # Larger, non-tile-multiple batch: exercises multi-step grid + pad-free partial
    # tail block (600 = 2*256 + 88).
    batch2 = 600
    x2 = jax.random.normal(k_x2, (batch2, in_size), jnp.float32)
    y2 = small_nn_forward(x2, w1, b1, w2, b2, tile_b=256)
    jax.block_until_ready(y2)
    assert y2.shape == (batch2, out_size)
    assert jnp.allclose(y2, _matched_reference(x2, w1, b1, w2, b2), atol=1e-3, rtol=1e-3)
    assert float(jnp.max(jnp.abs(y2 - _f32_reference(x2, w1, b1, w2, b2)))) < 5e-2

    print("KERNEL_OK")
</pallas_src>

<mosaic_0001>
module attributes {stable_mosaic.version = 11 : i64} {
  func.func @_mlp_kernel(%arg0: i32, %arg1: memref<8x16xf32, #tpu.memory_space<vmem>>, %arg2: memref<16x30xbf16, #tpu.memory_space<vmem>>, %arg3: memref<1x30xf32, #tpu.memory_space<vmem>>, %arg4: memref<30x4xbf16, #tpu.memory_space<vmem>>, %arg5: memref<1x4xf32, #tpu.memory_space<vmem>>, %arg6: memref<8x4xf32, #tpu.memory_space<vmem>>) attributes {dimension_semantics = [#tpu.dimension_semantics<parallel>], iteration_bounds = array<i64: 1>, scalar_prefetch = 0 : i64, scratch_operands = 0 : i64, tpu.core_type = #tpu.core_type<tc>, window_params = [{transform_indices = @transform_0, window_bounds = array<i64: 8, 16>}, {pipeline_mode = #tpu.pipeline_mode<synchronous>, transform_indices = @transform_1, window_bounds = array<i64: 16, 30>}, {pipeline_mode = #tpu.pipeline_mode<synchronous>, transform_indices = @transform_2, window_bounds = array<i64: 1, 30>}, {pipeline_mode = #tpu.pipeline_mode<synchronous>, transform_indices = @transform_3, window_bounds = array<i64: 30, 4>}, {pipeline_mode = #tpu.pipeline_mode<synchronous>, transform_indices = @transform_4, window_bounds = array<i64: 1, 4>}, {transform_indices = @transform_5, window_bounds = array<i64: 8, 4>}]} {
    %c0 = arith.constant 0 : index
    %c0_0 = arith.constant 0 : index
    %0 = vector.load %arg1[%c0, %c0_0] : memref<8x16xf32, #tpu.memory_space<vmem>>, vector<8x16xf32>
    %1 = arith.truncf %0 : vector<8x16xf32> to vector<8x16xbf16>
    %c0_1 = arith.constant 0 : index
    %c0_2 = arith.constant 0 : index
    %2 = vector.load %arg2[%c0_1, %c0_2] : memref<16x30xbf16, #tpu.memory_space<vmem>>, vector<16x30xbf16>
    %cst = arith.constant dense<0.000000e+00> : vector<8x30xf32>
    %3 = tpu.matmul %1, %2, %cst {dimension_numbers = #tpu.dot_dimension_numbers<[1], [0], [0], [1], [0, 0, 1, 1], [], []>} : vector<8x16xbf16>, vector<16x30xbf16>, vector<8x30xf32> -> vector<8x30xf32>
    %c0_3 = arith.constant 0 : index
    %c0_4 = arith.constant 0 : index
    %4 = vector.load %arg3[%c0_3, %c0_4] : memref<1x30xf32, #tpu.memory_space<vmem>>, vector<1x30xf32>
    %5 = vector.broadcast %4 : vector<1x30xf32> to vector<8x30xf32>
    %6 = arith.addf %3, %5 : vector<8x30xf32>
    %cst_5 = arith.constant 0.000000e+00 : f32
    %7 = vector.broadcast %cst_5 : f32 to vector<8x30xf32>
    %8 = arith.maximumf %6, %7 : vector<8x30xf32>
    %9 = arith.truncf %8 : vector<8x30xf32> to vector<8x30xbf16>
    %c0_6 = arith.constant 0 : index
    %c0_7 = arith.constant 0 : index
    %10 = vector.load %arg4[%c0_6, %c0_7] : memref<30x4xbf16, #tpu.memory_space<vmem>>, vector<30x4xbf16>
    %cst_8 = arith.constant dense<0.000000e+00> : vector<8x4xf32>
    %11 = tpu.matmul %9, %10, %cst_8 {dimension_numbers = #tpu.dot_dimension_numbers<[1], [0], [0], [1], [0, 0, 1, 1], [], []>} : vector<8x30xbf16>, vector<30x4xbf16>, vector<8x4xf32> -> vector<8x4xf32>
    %c0_9 = arith.constant 0 : index
    %c0_10 = arith.constant 0 : index
    %12 = vector.load %arg5[%c0_9, %c0_10] : memref<1x4xf32, #tpu.memory_space<vmem>>, vector<1x4xf32>
    %13 = vector.broadcast %12 : vector<1x4xf32> to vector<8x4xf32>
    %14 = arith.addf %11, %13 : vector<8x4xf32>
    %c0_11 = arith.constant 0 : index
    %c0_12 = arith.constant 0 : index
    %15 = vector.load %arg6[%c0_11, %c0_12] : memref<8x4xf32, #tpu.memory_space<vmem>>, vector<8x4xf32>
    tpu.vector_store %arg6[%c0_11, %c0_12], %14 {strides = array<i32>} : memref<8x4xf32, #tpu.memory_space<vmem>>, vector<8x4xf32>,
    return
  }
  func.func @transform_0(%arg0: i32) -> (i32, i32) {
    %c0_i32 = arith.constant 0 : i32
    %c0_i32_0 = arith.constant 0 : i32
    return %arg0, %c0_i32 : i32, i32
  }
  func.func @transform_1(%arg0: i32) -> (i32, i32) {
    %c0_i32 = arith.constant 0 : i32
    %c0_i32_0 = arith.constant 0 : i32
    %c0_i32_1 = arith.constant 0 : i32
    return %c0_i32, %c0_i32_0 : i32, i32
  }
  func.func @transform_2(%arg0: i32) -> (i32, i32) {
    %c0_i32 = arith.constant 0 : i32
    %c0_i32_0 = arith.constant 0 : i32
    %c0_i32_1 = arith.constant 0 : i32
    return %c0_i32, %c0_i32_0 : i32, i32
  }
  func.func @transform_3(%arg0: i32) -> (i32, i32) {
    %c0_i32 = arith.constant 0 : i32
    %c0_i32_0 = arith.constant 0 : i32
    %c0_i32_1 = arith.constant 0 : i32
    return %c0_i32, %c0_i32_0 : i32, i32
  }
  func.func @transform_4(%arg0: i32) -> (i32, i32) {
    %c0_i32 = arith.constant 0 : i32
    %c0_i32_0 = arith.constant 0 : i32
    %c0_i32_1 = arith.constant 0 : i32
    return %c0_i32, %c0_i32_0 : i32, i32
  }
  func.func @transform_5(%arg0: i32) -> (i32, i32) {
    %c0_i32 = arith.constant 0 : i32
    %c0_i32_0 = arith.constant 0 : i32
    return %arg0, %c0_i32 : i32, i32
  }
}

</mosaic_0001>

<llo_original>
// kernel: tpu_custom_call.1
$region0: #{tpu_custom_call.1}
  #allocation0 [shape = 'u32[]', space=smem, size = 0x4, offset = 0x4, fixed_abs, tag = 'smem constant byte address 0x4 - core index']
  #allocation1 [shape = 'u32[144,128]{1,0:T(1,128)}', space=vmem, size = 0x12000, scoped, tag = 'internal scratch']
  %s0 = inlined_call_operand.vmem [shape: f32[8,16], index: 0, kind: input, shape index: {}]
  %s1 = inlined_call_operand.vmem [shape: bf16[16,30], index: 1, kind: input, shape index: {}]
  %s2 = inlined_call_operand.vmem [shape: f32[1,30], index: 2, kind: input, shape index: {}]
  %s3 = inlined_call_operand.vmem [shape: bf16[30,4], index: 3, kind: input, shape index: {}]
  %s4 = inlined_call_operand.vmem [shape: f32[1,4], index: 4, kind: input, shape index: {}]
  %s5 = inlined_call_operand.vmem [shape: f32[8,4], index: 5, kind: output, shape index: {}]
  %s6 = sld [smem:[#allocation0]]
  $region30: #{tpu_custom_call.1} parent=0
    _
  %s8 = ssub.s32 1, %s6
  %s9 = scalar_select 0, %s8, %s6
  // Predicated region
  $region2: #{tpu_custom_call.1} parent=0 // pred_check
    _
  $region3: #{tpu_custom_call.1} parent=0 // pred_check_branch
    %11 = sbr.rel (0) target = $region5
  $region4: #{tpu_custom_call.1} parent=0 // pred_region
    _
  $region5: #{tpu_custom_call.1} parent=0 // pred_fallthru
    _
  // Predicated region
  $region6: #{tpu_custom_call.1} parent=0 // pred_check
    _
  $region7: #{tpu_custom_call.1} parent=0 // pred_check_branch
    %13 = sbr.rel (0) target = $region9
  $region8: #{tpu_custom_call.1} parent=0 // pred_region
    _
  $region9: #{tpu_custom_call.1} parent=0 // pred_fallthru
    _
  // Predicated region
  $region10: #{tpu_custom_call.1} parent=0 // pred_check
    _
  $region11: #{tpu_custom_call.1} parent=0 // pred_check_branch
    %15 = sbr.rel (0) target = $region13
  $region12: #{tpu_custom_call.1} parent=0 // pred_region
    _
  $region13: #{tpu_custom_call.1} parent=0 // pred_fallthru
    _
  // Predicated region
  $region14: #{tpu_custom_call.1} parent=0 // pred_check
    _
  $region15: #{tpu_custom_call.1} parent=0 // pred_check_branch
    %17 = sbr.rel (0) target = $region17
  $region16: #{tpu_custom_call.1} parent=0 // pred_region
    _
  $region17: #{tpu_custom_call.1} parent=0 // pred_fallthru
    _
  // Predicated region
  $region18: #{tpu_custom_call.1} parent=0 // pred_check
    _
  $region19: #{tpu_custom_call.1} parent=0 // pred_check_branch
    %19 = sbr.rel (0) target = $region21
  $region20: #{tpu_custom_call.1} parent=0 // pred_region
    _
  $region21: #{tpu_custom_call.1} parent=0 // pred_fallthru
    _
  %v21 = vld [vmem:[%s0] sm:$0xff]
  %v22 = vpack.c.bf16 %v21, %v21
  %v23 = vld [vmem:[%s1] sm:$0xf]
  %v24 = vld [vmem:[%s1 + $0x4] sm:$0xf]
  %v25 = vld [vmem:[%s2] sm:$0x1]
  %v27 = vlaneseq
  %v28 = vshrl.u32 %v27, 7
  %v29 = vsub.s32 0, %v28
  %v30 = vrot.slane %v25, %v29
  %v34 = vunpack.c.l.b16 %v23
  %v35 = vunpack.c.l.b16 %v24
  %v36 = vpack.c.b16 %v35, %v34
  %vm38 = vcmask 130048
  %v40 = vsel %vm38, %v22, 0
  %42 = vmatprep.subr.bf16.mxu0 0
  %43 = vmatpush1.bf16.msra.mxu0 %v36
  %44 = vmatprep.subr.bf16.mxu0 0
  %45 = vmatpush1.bf16.msra.mxu0 0
  %46 = vmatprep.subr.bf16.mxu0 0
  %47 = vmatpush1.bf16.msra.mxu0 0
  %48 = vmatprep.subr.bf16.mxu0 0
  %49 = vmatpush1.bf16.msra.mxu0 0
  %50 = vmatprep.subr.bf16.mxu0 0
  %51 = vmatpush1.bf16.msra.mxu0 0
  %52 = vmatprep.subr.bf16.mxu0 0
  %53 = vmatpush1.bf16.msra.mxu0 0
  %54 = vmatprep.subr.bf16.mxu0 0
  %55 = vmatpush1.bf16.msra.mxu0 0
  %56 = vmatprep.subr.bf16.mxu0 0
  %57 = vmatpush1.bf16.msra.mxu0 0
  %58 = vmatprep.subr.bf16.mxu0 0
  %59 = vmatpush1.bf16.msra.mxu0 0
  %60 = vmatprep.subr.bf16.mxu0 0
  %61 = vmatpush1.bf16.msra.mxu0 0
  %62 = vmatprep.subr.bf16.mxu0 0
  %63 = vmatpush1.bf16.msra.mxu0 0
  %64 = vmatprep.subr.bf16.mxu0 0
  %65 = vmatpush1.bf16.msra.mxu0 0
  %66 = vmatprep.subr.bf16.mxu0 0
  %67 = vmatpush1.bf16.msra.mxu0 0
  %68 = vmatprep.subr.bf16.mxu0 0
  %69 = vmatpush1.bf16.msra.mxu0 0
  %70 = vmatprep.subr.bf16.mxu0 0
  %71 = vmatpush1.bf16.msra.mxu0 0
  %72 = vmatprep.subr.bf16.mxu0 0
  %73 = vmatpush1.bf16.msra.mxu0 0
  %74 = vmatprep.mubr.bf16.mxu0 0
  %75 = vmatmul.mubr.bf16.gmra.mrb[0].mxu0 %v40
  %v76 = vpop.f32.mrb[0].mxu0
  %v77 = vadd.f32 %v30, %v76
  %v78 = vpop.f32.mrb[0].mxu0
  %v79 = vpop.f32.mrb[0].mxu0
  %v80 = vpop.f32.mrb[0].mxu0
  %81 = vdwg.mxu0
  %v82 = vmax.f32 %v77, 0.0
  %v83 = vpack.c.bf16 %v82, %v82
  %v84 = vld [vmem:[%s3] sm:$0xf]
  %v85 = vld [vmem:[%s3 + $0x4] sm:$0xf]
  %v86 = vld [vmem:[%s3 + $0x8] sm:$0xf]
  %v87 = vld [vmem:[%s3 + $0xc] sm:$0x7]
  %v88 = vld [vmem:[%s4] sm:$0x1]
  %v90 = vlaneseq
  %v91 = vshrl.u32 %v90, 7
  %v92 = vsub.s32 0, %v91
  %v93 = vrot.slane %v88, %v92
  %v99 = vunpack.c.l.b16 %v84
  %v100 = vunpack.c.l.b16 %v85
  %v101 = vunpack.c.l.b16 %v86
  %v102 = vunpack.c.l.b16 %v87
  %v103 = vpack.c.b16 %v100, %v99
  %v104 = vpack.c.b16 %v102, %v101
  %vm106 = vcmask 244736
  %v108 = vsel %vm106, %v83, 0
  %vm110 = vcmask 1046528
  %v112 = vsel %vm110, %v104, 0
  %114 = vmatprep.subr.bf16.mxu0 0
  %115 = vmatpush1.bf16.msra.mxu0 %v103
  %116 = vmatprep.subr.bf16.mxu0 0
  %117 = vmatpush1.bf16.msra.mxu0 %v112
  %118 = vmatprep.subr.bf16.mxu0 0
  %119 = vmatpush1.bf16.msra.mxu0 0
  %120 = vmatprep.subr.bf16.mxu0 0
  %121 = vmatpush1.bf16.msra.mxu0 0
  %122 = vmatprep.subr.bf16.mxu0 0
  %123 = vmatpush1.bf16.msra.mxu0 0
  %124 = vmatprep.subr.bf16.mxu0 0
  %125 = vmatpush1.bf16.msra.mxu0 0
  %126 = vmatprep.subr.bf16.mxu0 0
  %127 = vmatpush1.bf16.msra.mxu0 0
  %128 = vmatprep.subr.bf16.mxu0 0
  %129 = vmatpush1.bf16.msra.mxu0 0
  %130 = vmatprep.subr.bf16.mxu0 0
  %131 = vmatpush1.bf16.msra.mxu0 0
  %132 = vmatprep.subr.bf16.mxu0 0
  %133 = vmatpush1.bf16.msra.mxu0 0
  %134 = vmatprep.subr.bf16.mxu0 0
  %135 = vmatpush1.bf16.msra.mxu0 0
  %136 = vmatprep.subr.bf16.mxu0 0
  %137 = vmatpush1.bf16.msra.mxu0 0
  %138 = vmatprep.subr.bf16.mxu0 0
  %139 = vmatpush1.bf16.msra.mxu0 0
  %140 = vmatprep.subr.bf16.mxu0 0
  %141 = vmatpush1.bf16.msra.mxu0 0
  %142 = vmatprep.subr.bf16.mxu0 0
  %143 = vmatpush1.bf16.msra.mxu0 0
  %144 = vmatprep.subr.bf16.mxu0 0
  %145 = vmatpush1.bf16.msra.mxu0 0
  %146 = vmatprep.mubr.bf16.mxu0 0
  %147 = vmatmul.mubr.bf16.gmra.mrb[0].mxu0 %v108
  %v148 = vpop.f32.mrb[0].mxu0
  %v149 = vadd.f32 %v93, %v148
  %v150 = vpop.f32.mrb[0].mxu0
  %v151 = vpop.f32.mrb[0].mxu0
  %v152 = vpop.f32.mrb[0].mxu0
  %153 = vdwg.mxu0
  %vm154 = vcmask 31744
  %155 = vst.msk [vmem:[%s5] sm:$0xff] %vm154, %v149
  // Predicated region
  $region22: #{tpu_custom_call.1} parent=0 // pred_check
    _
  $region23: #{tpu_custom_call.1} parent=0 // pred_check_branch
    %157 = sbr.rel (0) target = $region25
  $region24: #{tpu_custom_call.1} parent=0 // pred_region
    _
  $region25: #{tpu_custom_call.1} parent=0 // pred_fallthru
    _
  // Predicated region
  $region26: #{tpu_custom_call.1} parent=0 // pred_check
    _
  $region27: #{tpu_custom_call.1} parent=0 // pred_check_branch
    %159 = sbr.rel (0) target = $region29
  $region28: #{tpu_custom_call.1} parent=0 // pred_region
    _
  $region29: #{tpu_custom_call.1} parent=0 // pred_fallthru
    _

</llo_original>
